<compile_context>
chip_gen: v7x
topology: tpu7x:2x2x1
jax: 0.10.0
libtpu: 0.0.40
codegen_flags: <defaults>
</compile_context>

<pallas_src>
from typing import Any

import jax
import jax.numpy as jnp
from jax.experimental import pallas as pl
from jax.experimental.pallas import tpu as pltpu


def _round_up(x: int, m: int) -> int:
    return ((x + m - 1) // m) * m


# ----------------------------------------------------------------------------
# Pallas kernel: tiled Linear (y = x @ W_t + b) with K-reduction accumulator
# ----------------------------------------------------------------------------
def _linear_kernel(x_ref, w_ref, b_ref, o_ref, acc_ref):
    # x_ref: (tm, tk) bf16   w_ref: (tk, tn) bf16   b_ref: (1, tn) f32
    # o_ref: (tm, tn) out    acc_ref: (tm, tn) f32 scratch (resident over K axis)
    k = pl.program_id(2)

    @pl.when(k == 0)
    def _init():
        acc_ref[...] = jnp.zeros_like(acc_ref)

    acc_ref[...] += jnp.dot(
        x_ref[...], w_ref[...], preferred_element_type=jnp.float32
    )

    @pl.when(k == pl.num_programs(2) - 1)
    def _finalize():
        o_ref[...] = (acc_ref[...] + b_ref[...]).astype(o_ref.dtype)


def pallas_linear(
    x2d: jnp.ndarray,
    w_t: jnp.ndarray,
    b2d: jnp.ndarray,
    *,
    tm_cap: int = 256,
    tn_cap: int = 256,
    tk_cap: int = 512,
    out_dtype=None,
) -> jnp.ndarray:
    """x2d: (R, H) bf16, w_t: (H, O) bf16, b2d: (1, O) f32 -> (R, O) out_dtype.

    Tile caps match the v6e 256x256 MXU; the resulting tiles (<= 256KiB each,
    double-buffered) fit comfortably in the default scoped VMEM on v5e/v6e/v7x.
    """
    R, H = x2d.shape
    Hw, O = w_t.shape
    assert Hw == H
    out_dtype = out_dtype if out_dtype is not None else x2d.dtype

    # Tile sizes: rows padded to a bf16 sublane multiple, lanes to multiples of 128.
    tm = min(tm_cap, _round_up(R, 16))
    tn = min(tn_cap, _round_up(O, 128))
    tk = min(tk_cap, _round_up(H, 128))

    Rp, Hp, Op = _round_up(R, tm), _round_up(H, tk), _round_up(O, tn)

    xp = x2d if (Rp, Hp) == (R, H) else jnp.pad(x2d, ((0, Rp - R), (0, Hp - H)))
    wp = w_t if (Hp, Op) == (H, O) else jnp.pad(w_t, ((0, Hp - H), (0, Op - O)))
    bp = b2d if Op == O else jnp.pad(b2d, ((0, 0), (0, Op - O)))

    grid = (Rp // tm, Op // tn, Hp // tk)

    bytes_accessed = (
        xp.size * xp.dtype.itemsize
        + wp.size * wp.dtype.itemsize
        + bp.size * bp.dtype.itemsize
        + Rp * Op * jnp.dtype(out_dtype).itemsize
    )

    out = pl.pallas_call(
        _linear_kernel,
        out_shape=jax.ShapeDtypeStruct((Rp, Op), out_dtype),
        grid=grid,
        in_specs=[
            pl.BlockSpec((tm, tk), lambda i, j, k: (i, k)),   # activations
            pl.BlockSpec((tk, tn), lambda i, j, k: (k, j)),   # weight (streamed)
            pl.BlockSpec((1, tn), lambda i, j, k: (0, j)),    # bias (N-indexed only)
        ],
        out_specs=pl.BlockSpec((tm, tn), lambda i, j, k: (i, j)),
        scratch_shapes=[pltpu.VMEM((tm, tn), jnp.float32)],
        compiler_params=pltpu.CompilerParams(
            dimension_semantics=("parallel", "parallel", "arbitrary"),
            vmem_limit_bytes=48 * 1024 * 1024,
        ),
        cost_estimate=pl.CostEstimate(
            flops=2 * Rp * Hp * Op,
            transcendentals=0,
            bytes_accessed=bytes_accessed,
        ),
    )(xp, wp, bp)

    if (Rp, Op) != (R, O):
        out = out[:R, :O]
    return out


# ----------------------------------------------------------------------------
# The wrapped ("orig") module: a deterministic Linear whose forward runs in Pallas
# ----------------------------------------------------------------------------
class PallasLinearModule:
    def __init__(self, in_features: int, out_features: int, key):
        kw, kb = jax.random.split(key)
        bound = 1.0 / (in_features ** 0.5)
        # PyTorch nn.Linear stores weight as (O, H); keep an f32 copy for reference.
        self.weight = jax.random.uniform(
            kw, (out_features, in_features), jnp.float32, -bound, bound
        )
        self.bias = jax.random.uniform(
            kb, (out_features,), jnp.float32, -bound, bound
        )
        # Pre-transposed + pre-cast once at init (would happen in load() for GGUF):
        # (H, O) bf16 for the MXU, (1, O) f32 bias for the finalize step.
        self.weight_t_bf16 = jnp.asarray(self.weight.T, dtype=jnp.bfloat16)
        self.bias_2d = self.bias.reshape(1, out_features).astype(jnp.float32)
        self.in_features = in_features
        self.out_features = out_features

    def forward(self, x: jnp.ndarray) -> jnp.ndarray:
        # x: (B, S, H) -> (B, S, O)
        B, S, H = x.shape
        x2d = x.reshape(B * S, H).astype(jnp.bfloat16)
        y = pallas_linear(x2d, self.weight_t_bf16, self.bias_2d, out_dtype=x.dtype)
        return y.reshape(B, S, self.out_features)


# ----------------------------------------------------------------------------
# BaseInjectedModule: pure delegation wrapper (JAX analogue of the PyTorch class)
# ----------------------------------------------------------------------------
class BaseInjectedModule:
    def __init__(self, key: str, gguf_loader: Any, config: Any, orig_module: Any,
                 prefill_device: str = "tpu", generate_device: str = "tpu", **kwargs):
        object.__setattr__(self, "orig_module", orig_module)
        object.__setattr__(self, "key", key)
        object.__setattr__(self, "gguf_loader", gguf_loader)
        object.__setattr__(self, "config", config)
        object.__setattr__(self, "prefill_device", prefill_device)
        object.__setattr__(self, "generate_device", generate_device)
        object.__setattr__(self, "device", generate_device)

    def __getattr__(self, name: str) -> Any:
        # Attribute fall-through to the wrapped module, mirroring the PyTorch impl.
        orig = object.__getattribute__(self, "orig_module")
        return getattr(orig, name)

    def forward(self, *args, **kwargs):
        # Exact semantics of the reference: delegate to orig_module.forward.
        return self.orig_module.forward(*args, **kwargs)

    def load(self):
        # TODO(synk): GGUF weight loading has no Pallas equivalent (file I/O);
        # parameters are initialized deterministically in-script instead.
        pass


# ----------------------------------------------------------------------------
# Demo / correctness check
# ----------------------------------------------------------------------------
if __name__ == "__main__":
    rng = jax.random.PRNGKey(0)
    k_x, k_mod = jax.random.split(rng)

    # Small but MXU/lane-friendly shapes; grid = (1, 2, 2) exercises the
    # K-accumulator, the N-parallel axis and the pipelined weight streaming.
    B, S, H, O = 2, 8, 1024, 512
    x = jax.random.normal(k_x, (B, S, H), jnp.float32)

    orig = PallasLinearModule(H, O, k_mod)
    wrapped = BaseInjectedModule(
        key="model.layers.0.mlp",
        gguf_loader=None,
        config=None,
        orig_module=orig,
    )

    y = wrapped.forward(x)
    y = jax.block_until_ready(y)

    # Reference: same math the kernel does (bf16 operands, f32 accumulate + bias).
    x2d_up = x.reshape(B * S, H).astype(jnp.bfloat16).astype(jnp.float32)
    w_up = orig.weight_t_bf16.astype(jnp.float32)
    y_ref = (x2d_up @ w_up + orig.bias[None, :]).reshape(B, S, O)

    assert y.shape == (B, S, O)
    assert jnp.allclose(y, y_ref, atol=1e-3, rtol=1e-3)

    print("KERNEL_OK")
</pallas_src>

<mosaic_0001>
module attributes {stable_mosaic.version = 11 : i64} {
  func.func @_linear_kernel(%arg0: i32, %arg1: i32, %arg2: i32, %arg3: memref<16x512xbf16, #tpu.memory_space<vmem>>, %arg4: memref<512x256xbf16, #tpu.memory_space<vmem>>, %arg5: memref<1x256xf32, #tpu.memory_space<vmem>>, %arg6: memref<16x256xf32, #tpu.memory_space<vmem>>, %arg7: memref<16x256xf32, #tpu.memory_space<vmem>>) attributes {dimension_semantics = [#tpu.dimension_semantics<parallel>, #tpu.dimension_semantics<parallel>, #tpu.dimension_semantics<arbitrary>], iteration_bounds = array<i64: 1, 2, 2>, scalar_prefetch = 0 : i64, scratch_operands = 1 : i64, tpu.core_type = #tpu.core_type<tc>, window_params = [{transform_indices = @transform_0, window_bounds = array<i64: 16, 512>}, {transform_indices = @transform_1, window_bounds = array<i64: 512, 256>}, {transform_indices = @transform_2, window_bounds = array<i64: 1, 256>}, {transform_indices = @transform_3, window_bounds = array<i64: 16, 256>}]} {
    %c0_i32 = arith.constant 0 : i32
    %0 = arith.cmpi eq, %arg2, %c0_i32 : i32
    %1 = arith.extui %0 : i1 to i32
    %c0_i32_0 = arith.constant 0 : i32
    %2 = arith.cmpi ne, %1, %c0_i32_0 : i32
    scf.if %2 {
      %cst_9 = arith.constant 0.000000e+00 : f32
      %12 = vector.broadcast %cst_9 : f32 to vector<16x256xf32>
      %c0_10 = arith.constant 0 : index
      %c0_11 = arith.constant 0 : index
      %13 = vector.load %arg7[%c0_10, %c0_11] : memref<16x256xf32, #tpu.memory_space<vmem>>, vector<16x256xf32>
      tpu.vector_store %arg7[%c0_10, %c0_11], %12 {strides = array<i32>} : memref<16x256xf32, #tpu.memory_space<vmem>>, vector<16x256xf32>,
    } else {
    }
    %c0 = arith.constant 0 : index
    %c0_1 = arith.constant 0 : index
    %3 = vector.load %arg7[%c0, %c0_1] : memref<16x256xf32, #tpu.memory_space<vmem>>, vector<16x256xf32>
    %c0_2 = arith.constant 0 : index
    %c0_3 = arith.constant 0 : index
    %4 = vector.load %arg3[%c0_2, %c0_3] : memref<16x512xbf16, #tpu.memory_space<vmem>>, vector<16x512xbf16>
    %c0_4 = arith.constant 0 : index
    %c0_5 = arith.constant 0 : index
    %5 = vector.load %arg4[%c0_4, %c0_5] : memref<512x256xbf16, #tpu.memory_space<vmem>>, vector<512x256xbf16>
    %cst = arith.constant dense<0.000000e+00> : vector<16x256xf32>
    %6 = tpu.matmul %4, %5, %cst {dimension_numbers = #tpu.dot_dimension_numbers<[1], [0], [0], [1], [0, 0, 1, 1], [], []>} : vector<16x512xbf16>, vector<512x256xbf16>, vector<16x256xf32> -> vector<16x256xf32>
    %7 = arith.addf %3, %6 : vector<16x256xf32>
    %c0_6 = arith.constant 0 : index
    %c0_7 = arith.constant 0 : index
    %8 = vector.load %arg7[%c0_6, %c0_7] : memref<16x256xf32, #tpu.memory_space<vmem>>, vector<16x256xf32>
    tpu.vector_store %arg7[%c0_6, %c0_7], %7 {strides = array<i32>} : memref<16x256xf32, #tpu.memory_space<vmem>>, vector<16x256xf32>,
    %c1_i32 = arith.constant 1 : i32
    %9 = arith.cmpi eq, %arg2, %c1_i32 : i32
    %10 = arith.extui %9 : i1 to i32
    %c0_i32_8 = arith.constant 0 : i32
    %11 = arith.cmpi ne, %10, %c0_i32_8 : i32
    scf.if %11 {
      %c0_9 = arith.constant 0 : index
      %c0_10 = arith.constant 0 : index
      %12 = vector.load %arg7[%c0_9, %c0_10] : memref<16x256xf32, #tpu.memory_space<vmem>>, vector<16x256xf32>
      %c0_11 = arith.constant 0 : index
      %c0_12 = arith.constant 0 : index
      %13 = vector.load %arg5[%c0_11, %c0_12] : memref<1x256xf32, #tpu.memory_space<vmem>>, vector<1x256xf32>
      %14 = vector.broadcast %13 : vector<1x256xf32> to vector<16x256xf32>
      %15 = arith.addf %12, %14 : vector<16x256xf32>
      %c0_13 = arith.constant 0 : index
      %c0_14 = arith.constant 0 : index
      %16 = vector.load %arg6[%c0_13, %c0_14] : memref<16x256xf32, #tpu.memory_space<vmem>>, vector<16x256xf32>
      tpu.vector_store %arg6[%c0_13, %c0_14], %15 {strides = array<i32>} : memref<16x256xf32, #tpu.memory_space<vmem>>, vector<16x256xf32>,
    } else {
    }
    return
  }
  func.func @transform_0(%arg0: i32, %arg1: i32, %arg2: i32) -> (i32, i32) {
    %c0_i32 = arith.constant 0 : i32
    return %arg0, %arg2 : i32, i32
  }
  func.func @transform_1(%arg0: i32, %arg1: i32, %arg2: i32) -> (i32, i32) {
    %c0_i32 = arith.constant 0 : i32
    return %arg2, %arg1 : i32, i32
  }
  func.func @transform_2(%arg0: i32, %arg1: i32, %arg2: i32) -> (i32, i32) {
    %c0_i32 = arith.constant 0 : i32
    %c0_i32_0 = arith.constant 0 : i32
    return %c0_i32, %arg1 : i32, i32
  }
  func.func @transform_3(%arg0: i32, %arg1: i32, %arg2: i32) -> (i32, i32) {
    %c0_i32 = arith.constant 0 : i32
    return %arg0, %arg1 : i32, i32
  }
}

</mosaic_0001>

<llo_original>
// kernel: tpu_custom_call.1
$region0: #{tpu_custom_call.1}
  #allocation0 [shape = 'u32[]', space=smem, size = 0x4, offset = 0x4, fixed_abs, tag = 'smem constant byte address 0x4 - core index']
  #allocation1 [shape = 'u32[144,128]{1,0:T(1,128)}', space=vmem, size = 0x12000, scoped, tag = 'internal scratch']
  #allocation2 [shape = 'f32[16,256]{1,0:T(8,128)}', space=vmem, size = 0x4000, scoped, tag = 'scratch operand']
  %s0 = inlined_call_operand.hbm [shape: bf16[16,1024], index: 0, kind: input, shape index: {}]
  %s1 = inlined_call_operand.hbm [shape: bf16[1024,512], index: 1, kind: input, shape index: {}]
  %s2 = inlined_call_operand.vmem [shape: f32[1,512], index: 2, kind: input, shape index: {}]
  %s3 = inlined_call_operand.hbm [shape: f32[16,512], index: 3, kind: output, shape index: {}]
  %s4 = sld [smem:[#allocation0]]
  $region61: #{tpu_custom_call.1} parent=0
    _
  %s6 = ssub.s32 1, %s4
  %s7 = scalar_select 0, %s6, %s4
  $region1: #{tpu_custom_call.1} parent=0
    #allocation3 [shape = 'u8[32768]{0}', space=vmem, size = 0x8000, scoped, tag = 'input window, operand 0']
    #allocation4 [shape = 's32[2]{0}', space=sflag, size = 0x8, scoped, tag = 'scoped memory for tpu_custom_call.1']
    #allocation5 [shape = 's32[2]{0}', space=sflag, size = 0x8, scoped, tag = 'scoped memory for tpu_custom_call.1']
    #allocation6 [shape = 'u8[524288]{0}', space=vmem, size = 0x80000, scoped, tag = 'input window, operand 1']
    #allocation7 [shape = 's32[2]{0}', space=sflag, size = 0x8, scoped, tag = 'scoped memory for tpu_custom_call.1']
    #allocation8 [shape = 'u8[32768]{0}', space=vmem, size = 0x8000, scoped, tag = 'output window, operand 0']
    %8 = vsyncpa [#allocation4], 0
    %s9 = scalar_lea.sflag [#allocation4], 1
    %10 = vsyncpa %s9, 0
    %11 = vsyncpa [#allocation7], 0
    %s12 = scalar_lea.sflag [#allocation7], 1
    %13 = vsyncpa %s12, 0
    %14 = vsyncpa [#allocation5], 0
    %s15 = scalar_lea.sflag [#allocation5], 1
    %16 = vsyncpa %s15, 0
    loop: start=0, step=1, limit=6
    $region2: #{tpu_custom_call.1} parent=1 // loop_pre_header
      _
    $region3: #{tpu_custom_call.1} parent=1 // loop_header
      %s18 = sphi 0, %s22
      %p19 = scmp.ge.s32.totalorder %s18, 6
      %s25 = sphi 0, %s44
      %s26 = sphi 0, %s40
      %s27 = sphi 0, %s36
      %s28 = sphi 0, %s25
      %s29 = sphi 0, %s26
      %s30 = sphi 0, %s27
      %s31 = sphi 0, %s28
      %s32 = sphi 0, %s29
      %s33 = sphi 0, %s30
      %s49 = sphi 0, %s51
      %s52 = sphi 0, %s49
      %s53 = sphi 0, %s52
      %s69 = sphi 0, %s53
      %s77 = sphi 0, %s79
      %s80 = sphi 0, %s77
      %s81 = sphi 0, %s80
      %s97 = sphi 0, %s81
      %s103 = sphi 0, %s105
      %s106 = sphi 0, %s103
      %s107 = sphi 0, %s106
      %s123 = sphi 0, %s107
      %s131 = sphi 0, %s133
      %s134 = sphi 0, %s131
      %s135 = sphi 0, %s134
      %s151 = sphi 0, %s135
    $region4: #{tpu_custom_call.1} parent=1 // loop_header_branch
      %21 = sbr.rel (%p19) target = $region8
    $region5: #{tpu_custom_call.1} parent=1 // loop_body
      %s23 = ssub.s32 %s18, 1
      %s24 = ssub.s32 %s18, 2
      %s34 = sadd.s32 1, %s27
      %p35 = scmp.ge.s32.totalorder %s34, 2
      %s36 = scalar_select %p35, 0, %s34
      %s37 = sadd.s32 1, %s26
      %s38 = scalar_select %p35, %s37, %s26
      %p39 = scmp.ge.s32.totalorder %s38, 2
      %s40 = scalar_select %p39, 0, %s38
      %s41 = sadd.s32 1, %s25
      %s42 = scalar_select %p39, %s41, %s25
      %p43 = scmp.ge.s32.totalorder %s42, 1
      %s44 = scalar_select %p43, 0, %s42
      %s45 = ssub.s32 %s25, %s44
      %s46 = ssub.s32 %s27, %s36
      %s47 = sor.u32 %s45, %s46
      %p48 = scmp.eq.s32.totalorder %s47, 0
      %s50 = sadd.s32 %s49, 1
      %s51 = scalar_select %p48, %s49, %s50
      %p54 = pneg %p48
      %p55 = scmp.eq.s32.totalorder %s18, 3
      %p56 = por %p54, %p55
      %p57 = scmp.ne.s32.totalorder %s49, %s52
      %p58 = scmp.eq.s32.totalorder %s18, 0
      %p59 = por %p57, %p58
      %p60 = scmp.ne.s32.totalorder %s49, %s52
      %p61 = scmp.eq.s32.totalorder %s23, 3
      %p62 = por %p60, %p61
      %p63 = scmp.ne.s32.totalorder %s52, %s53
      %p64 = scmp.eq.s32.totalorder %s23, 0
      %p65 = por %p63, %p64
      %p66 = scmp.ne.s32.totalorder %s52, %s53
      %p67 = scmp.eq.s32.totalorder %s24, 3
      %p68 = por %p66, %p67
      %p70 = scmp.ne.s32.totalorder %s53, %s69
      %p71 = scmp.eq.s32.totalorder %s24, 0
      %p72 = por %p70, %p71
      %s73 = ssub.s32 %s27, %s36
      %s74 = ssub.s32 %s26, %s40
      %s75 = sor.u32 %s73, %s74
      %p76 = scmp.eq.s32.totalorder %s75, 0
      %s78 = sadd.s32 %s77, 1
      %s79 = scalar_select %p76, %s77, %s78
      %p82 = pneg %p76
      %p83 = scmp.eq.s32.totalorder %s18, 3
      %p84 = por %p82, %p83
      %p85 = scmp.ne.s32.totalorder %s77, %s80
      %p86 = scmp.eq.s32.totalorder %s18, 0
      %p87 = por %p85, %p86
      %p88 = scmp.ne.s32.totalorder %s77, %s80
      %p89 = scmp.eq.s32.totalorder %s23, 3
      %p90 = por %p88, %p89
      %p91 = scmp.ne.s32.totalorder %s80, %s81
      %p92 = scmp.eq.s32.totalorder %s23, 0
      %p93 = por %p91, %p92
      %p94 = scmp.ne.s32.totalorder %s80, %s81
      %p95 = scmp.eq.s32.totalorder %s24, 3
      %p96 = por %p94, %p95
      %p98 = scmp.ne.s32.totalorder %s81, %s97
      %p99 = scmp.eq.s32.totalorder %s24, 0
      %p100 = por %p98, %p99
      %s101 = ssub.s32 %s26, %s40
      %p102 = scmp.eq.s32.totalorder %s101, 0
      %s104 = sadd.s32 %s103, 1
      %s105 = scalar_select %p102, %s103, %s104
      %p108 = pneg %p102
      %p109 = scmp.eq.s32.totalorder %s18, 3
      %p110 = por %p108, %p109
      %p111 = scmp.ne.s32.totalorder %s103, %s106
      %p112 = scmp.eq.s32.totalorder %s18, 0
      %p113 = por %p111, %p112
      %p114 = scmp.ne.s32.totalorder %s103, %s106
      %p115 = scmp.eq.s32.totalorder %s23, 3
      %p116 = por %p114, %p115
      %p117 = scmp.ne.s32.totalorder %s106, %s107
      %p118 = scmp.eq.s32.totalorder %s23, 0
      %p119 = por %p117, %p118
      %p120 = scmp.ne.s32.totalorder %s106, %s107
      %p121 = scmp.eq.s32.totalorder %s24, 3
      %p122 = por %p120, %p121
      %p124 = scmp.ne.s32.totalorder %s107, %s123
      %p125 = scmp.eq.s32.totalorder %s24, 0
      %p126 = por %p124, %p125
      %s127 = ssub.s32 %s25, %s44
      %s128 = ssub.s32 %s26, %s40
      %s129 = sor.u32 %s127, %s128
      %p130 = scmp.eq.s32.totalorder %s129, 0
      %s132 = sadd.s32 %s131, 1
      %s133 = scalar_select %p130, %s131, %s132
      %p136 = pneg %p130
      %p137 = scmp.eq.s32.totalorder %s18, 3
      %p138 = por %p136, %p137
      %p139 = scmp.ne.s32.totalorder %s131, %s134
      %p140 = scmp.eq.s32.totalorder %s18, 0
      %p141 = por %p139, %p140
      %p142 = scmp.ne.s32.totalorder %s131, %s134
      %p143 = scmp.eq.s32.totalorder %s23, 3
      %p144 = por %p142, %p143
      %p145 = scmp.ne.s32.totalorder %s134, %s135
      %p146 = scmp.eq.s32.totalorder %s23, 0
      %p147 = por %p145, %p146
      %p148 = scmp.ne.s32.totalorder %s134, %s135
      %p149 = scmp.eq.s32.totalorder %s24, 3
      %p150 = por %p148, %p149
      %p152 = scmp.ne.s32.totalorder %s135, %s151
      %p153 = scmp.eq.s32.totalorder %s24, 0
      %p154 = por %p152, %p153
      %p155 = scmp.le.s32.totalorder 1, %s18
      %p156 = scmp.lt.s32.totalorder %s18, 5
      %p157 = pnand %p155, %p156
      %p158 = pneg %p157
      // Predicated region
      $region9: #{tpu_custom_call.1} parent=5 // pred_check
        _
      $region10: #{tpu_custom_call.1} parent=5 // pred_check_branch
        %160 = sbr.rel (%p157) target = $region12
      $region11: #{tpu_custom_call.1} parent=5 // pred_region
        %s161 = ssub.s32 %s18, 1
      $region12: #{tpu_custom_call.1} parent=5 // pred_fallthru
        _
      %p162 = scmp.lt.s32.totalorder %s18, 4
      // Predicated region
      $region13: #{tpu_custom_call.1} parent=5 // pred_check
        %p163 = pneg %p162
      $region14: #{tpu_custom_call.1} parent=5 // pred_check_branch
        %165 = sbr.rel (%p163) target = $region16
      $region15: #{tpu_custom_call.1} parent=5 // pred_region
        // Predicated region
        $region17: #{tpu_custom_call.1} parent=15 // pred_check
          %p166 = pneg %p59
        $region18: #{tpu_custom_call.1} parent=15 // pred_check_branch
          %168 = sbr.rel (%p166) target = $region20
        $region19: #{tpu_custom_call.1} parent=15 // pred_region
          %s169 = sand.u32 %s49, 1
          %s170 = scalar_lea.sflag [#allocation4], %s169
          %s171 = sand.u32 %s49, 1
          %s172 = smul.addr %s171, 32
          %s173 = scalar_lea.vmem [#allocation3], %s172
          %s174 = smul.u32 2, %s25
          %s175 = smul.u32 4, %s27
          %s177 = ssub.s32 512, 512
          %178 = vsyncadd %s170, %s177
          %s179 = smul.addr %s174, 8
          %s180 = sadd.s32 %s175, %s179
          %s181 = smul.addr %s180, 64
          %s182 = scalar_lea.hbm %s0, %s181
          %s183 = sshll.u32 %s173, 4
          %s184 = int_to_ptr.vmem [resolvable:$true] %s183
          %189 = dma.hbm_to_vmem [thread:$0]  %s182, 512, %s184, %s170, 512, 256, 16
        $region20: #{tpu_custom_call.1} parent=15 // pred_fallthru
          _
        // Predicated region
        $region21: #{tpu_custom_call.1} parent=15 // pred_check
          %p190 = pneg %p87
        $region22: #{tpu_custom_call.1} parent=15 // pred_check_branch
          %192 = sbr.rel (%p190) target = $region24
        $region23: #{tpu_custom_call.1} parent=15 // pred_region
          %s193 = sand.u32 %s77, 1
          %s194 = scalar_lea.sflag [#allocation7], %s193
          %s195 = sand.u32 %s77, 1
          %s196 = smul.addr %s195, 512
          %s197 = scalar_lea.vmem [#allocation6], %s196
          %s198 = smul.u32 64, %s27
          %s199 = smul.u32 2, %s26
          %s201 = ssub.s32 8192, 8192
          %202 = vsyncadd %s194, %s201
          %s203 = smul.addr %s198, 4
          %s204 = sadd.s32 %s199, %s203
          %s205 = smul.addr %s204, 64
          %s206 = scalar_lea.hbm %s1, %s205
          %s207 = sshll.u32 %s197, 4
          %s208 = int_to_ptr.vmem [resolvable:$true] %s207
          %213 = dma.hbm_to_vmem [thread:$0]  %s206, 8192, %s208, %s194, 256, 128, 8
        $region24: #{tpu_custom_call.1} parent=15 // pred_fallthru
          _
        // Predicated region
        $region25: #{tpu_custom_call.1} parent=15 // pred_check
          %p214 = pneg %p113
        $region26: #{tpu_custom_call.1} parent=15 // pred_check_branch
          %216 = sbr.rel (%p214) target = $region28
        $region27: #{tpu_custom_call.1} parent=15 // pred_region
          %s217 = smul.u32 2, %s26
          %p218 = scmp.lt.s32.totalorder %s217, 3
          %s219 = scalar_select %p218, %s217, 3
          %s220 = scalar_lea.vmem %s2, %s219
          %s221 = smul.u32 2, %s26
        $region28: #{tpu_custom_call.1} parent=15 // pred_fallthru
          _
      $region16: #{tpu_custom_call.1} parent=5 // pred_fallthru
        _
      %p222 = scmp.le.s32.totalorder 1, %s18
      %p223 = scmp.lt.s32.totalorder %s18, 5
      %p224 = pnand %p222, %p223
      %p225 = pneg %p224
      // Predicated region
      $region29: #{tpu_custom_call.1} parent=5 // pred_check
        _
      $region30: #{tpu_custom_call.1} parent=5 // pred_check_branch
        %227 = sbr.rel (%p224) target = $region32
      $region31: #{tpu_custom_call.1} parent=5 // pred_region
        %s228 = ssub.s32 %s18, 1
        %s229 = sand.u32 %s52, 1
        %s230 = scalar_lea.sflag [#allocation4], %s229
        %s231 = sand.u32 %s52, 1
        %s232 = smul.addr %s231, 32
        %s233 = scalar_lea.vmem [#allocation3], %s232
        // Predicated region
        $region33: #{tpu_custom_call.1} parent=31 // pred_check
          %p234 = pneg %p65
        $region34: #{tpu_custom_call.1} parent=31 // pred_check_branch
          %236 = sbr.rel (%p234) target = $region36
        $region35: #{tpu_custom_call.1} parent=31 // pred_region
          %237 = dma.done %s230, 512
        $region36: #{tpu_custom_call.1} parent=31 // pred_fallthru
          _
        %s238 = sand.u32 %s80, 1
        %s239 = scalar_lea.sflag [#allocation7], %s238
        %s240 = sand.u32 %s80, 1
        %s241 = smul.addr %s240, 512
        %s242 = scalar_lea.vmem [#allocation6], %s241
        // Predicated region
        $region37: #{tpu_custom_call.1} parent=31 // pred_check
          %p243 = pneg %p93
        $region38: #{tpu_custom_call.1} parent=31 // pred_check_branch
          %245 = sbr.rel (%p243) target = $region40
        $region39: #{tpu_custom_call.1} parent=31 // pred_region
          %246 = dma.done %s239, 8192
        $region40: #{tpu_custom_call.1} parent=31 // pred_fallthru
          _
        %s247 = sand.u32 %s52, 1
        %s248 = scalar_lea.sflag [#allocation4], %s247
        %s249 = sand.u32 %s52, 1
        %s250 = smul.addr %s249, 32
        %s251 = scalar_lea.vmem [#allocation3], %s250
        %p252 = pneg %p65
        %p253 = pneg %p62
        %s254 = sand.u32 %s80, 1
        %s255 = scalar_lea.sflag [#allocation7], %s254
        %s256 = sand.u32 %s80, 1
        %s257 = smul.addr %s256, 512
        %s258 = scalar_lea.vmem [#allocation6], %s257
        %p259 = pneg %p93
        %p260 = pneg %p90
        %s261 = smul.u32 2, %s29
        %p262 = scmp.lt.s32.totalorder %s261, 3
        %s263 = scalar_select %p262, %s261, 3
        %s264 = scalar_lea.vmem %s2, %s263
        %p265 = pneg %p119
        %p266 = pneg %p116
        %p267 = pneg %p147
        %p268 = pneg %p144
        %s269 = sand.u32 %s134, 1
        %s270 = scalar_lea.sflag [#allocation5], %s269
        %s271 = sand.u32 %s134, 1
        %s272 = smul.addr %s271, 32
        %s273 = scalar_lea.vmem [#allocation8], %s272
        %s274 = smul.u32 2, %s28
        %s275 = smul.u32 4, %s30
        %s276 = smul.u32 64, %s30
        %s277 = smul.u32 2, %s29
        %s278 = smul.u32 2, %s29
        %p279 = scmp.lt.s32.totalorder %s278, 3
        %s280 = scalar_select %p279, %s278, 3
        %s281 = scalar_lea.vmem %s2, %s280
        %s282 = smul.u32 2, %s29
        %s283 = smul.u32 2, %s28
        %s284 = smul.u32 2, %s29
        %p285 = scmp.eq.s32.totalorder %s30, 0
        // Predicated region
        $region41: #{tpu_custom_call.1} parent=31 // pred_check
          %p286 = pneg %p285
        $region42: #{tpu_custom_call.1} parent=31 // pred_check_branch
          %288 = sbr.rel (%p286) target = $region44
        $region43: #{tpu_custom_call.1} parent=31 // pred_region
          %289 = vst [vmem:[#allocation2] sm:$0xff] 0.0
          %290 = vst [vmem:[#allocation2 + $0x8] sm:$0xff] 0.0
          %291 = vst [vmem:[#allocation2 + $0x10] sm:$0xff] 0.0
          %292 = vst [vmem:[#allocation2 + $0x18] sm:$0xff] 0.0
        $region44: #{tpu_custom_call.1} parent=31 // pred_fallthru
          _
        %v293 = vld [vmem:[#allocation2] sm:$0xff]
        %v294 = vld [vmem:[#allocation2 + $0x8] sm:$0xff]
        %v295 = vld [vmem:[#allocation2 + $0x10] sm:$0xff]
        %v296 = vld [vmem:[#allocation2 + $0x18] sm:$0xff]
        %v297 = vld [vmem:[%s233] sm:$0xff]
        %v298 = vld [vmem:[%s233 + $0x8] sm:$0xff]
        %v299 = vld [vmem:[%s233 + $0x10] sm:$0xff]
        %v300 = vld [vmem:[%s233 + $0x18] sm:$0xff]
        %v301 = vld [vmem:[%s242] sm:$0xff]
        %v302 = vld [vmem:[%s242 + $0x8] sm:$0xff]
        %v303 = vld [vmem:[%s242 + $0x10] sm:$0xff]
        %v304 = vld [vmem:[%s242 + $0x18] sm:$0xff]
        %v305 = vld [vmem:[%s242 + $0x20] sm:$0xff]
        %v306 = vld [vmem:[%s242 + $0x28] sm:$0xff]
        %v307 = vld [vmem:[%s242 + $0x30] sm:$0xff]
        %v308 = vld [vmem:[%s242 + $0x38] sm:$0xff]
        %v309 = vld [vmem:[%s242 + $0x40] sm:$0xff]
        %v310 = vld [vmem:[%s242 + $0x48] sm:$0xff]
        %v311 = vld [vmem:[%s242 + $0x50] sm:$0xff]
        %v312 = vld [vmem:[%s242 + $0x58] sm:$0xff]
        %v313 = vld [vmem:[%s242 + $0x60] sm:$0xff]
        %v314 = vld [vmem:[%s242 + $0x68] sm:$0xff]
        %v315 = vld [vmem:[%s242 + $0x70] sm:$0xff]
        %v316 = vld [vmem:[%s242 + $0x78] sm:$0xff]
        %v317 = vld [vmem:[%s242 + $0x80] sm:$0xff]
        %v318 = vld [vmem:[%s242 + $0x88] sm:$0xff]
        %v319 = vld [vmem:[%s242 + $0x90] sm:$0xff]
        %v320 = vld [vmem:[%s242 + $0x98] sm:$0xff]
        %v321 = vld [vmem:[%s242 + $0xa0] sm:$0xff]
        %v322 = vld [vmem:[%s242 + $0xa8] sm:$0xff]
        %v323 = vld [vmem:[%s242 + $0xb0] sm:$0xff]
        %v324 = vld [vmem:[%s242 + $0xb8] sm:$0xff]
        %v325 = vld [vmem:[%s242 + $0xc0] sm:$0xff]
        %v326 = vld [vmem:[%s242 + $0xc8] sm:$0xff]
        %v327 = vld [vmem:[%s242 + $0xd0] sm:$0xff]
        %v328 = vld [vmem:[%s242 + $0xd8] sm:$0xff]
        %v329 = vld [vmem:[%s242 + $0xe0] sm:$0xff]
        %v330 = vld [vmem:[%s242 + $0xe8] sm:$0xff]
        %v331 = vld [vmem:[%s242 + $0xf0] sm:$0xff]
        %v332 = vld [vmem:[%s242 + $0xf8] sm:$0xff]
        %v333 = vld [vmem:[%s242 + $0x100] sm:$0xff]
        %v334 = vld [vmem:[%s242 + $0x108] sm:$0xff]
        %v335 = vld [vmem:[%s242 + $0x110] sm:$0xff]
        %v336 = vld [vmem:[%s242 + $0x118] sm:$0xff]
        %v337 = vld [vmem:[%s242 + $0x120] sm:$0xff]
        %v338 = vld [vmem:[%s242 + $0x128] sm:$0xff]
        %v339 = vld [vmem:[%s242 + $0x130] sm:$0xff]
        %v340 = vld [vmem:[%s242 + $0x138] sm:$0xff]
        %v341 = vld [vmem:[%s242 + $0x140] sm:$0xff]
        %v342 = vld [vmem:[%s242 + $0x148] sm:$0xff]
        %v343 = vld [vmem:[%s242 + $0x150] sm:$0xff]
        %v344 = vld [vmem:[%s242 + $0x158] sm:$0xff]
        %v345 = vld [vmem:[%s242 + $0x160] sm:$0xff]
        %v346 = vld [vmem:[%s242 + $0x168] sm:$0xff]
        %v347 = vld [vmem:[%s242 + $0x170] sm:$0xff]
        %v348 = vld [vmem:[%s242 + $0x178] sm:$0xff]
        %v349 = vld [vmem:[%s242 + $0x180] sm:$0xff]
        %v350 = vld [vmem:[%s242 + $0x188] sm:$0xff]
        %v351 = vld [vmem:[%s242 + $0x190] sm:$0xff]
        %v352 = vld [vmem:[%s242 + $0x198] sm:$0xff]
        %v353 = vld [vmem:[%s242 + $0x1a0] sm:$0xff]
        %v354 = vld [vmem:[%s242 + $0x1a8] sm:$0xff]
        %v355 = vld [vmem:[%s242 + $0x1b0] sm:$0xff]
        %v356 = vld [vmem:[%s242 + $0x1b8] sm:$0xff]
        %v357 = vld [vmem:[%s242 + $0x1c0] sm:$0xff]
        %v358 = vld [vmem:[%s242 + $0x1c8] sm:$0xff]
        %v359 = vld [vmem:[%s242 + $0x1d0] sm:$0xff]
        %v360 = vld [vmem:[%s242 + $0x1d8] sm:$0xff]
        %v361 = vld [vmem:[%s242 + $0x1e0] sm:$0xff]
        %v362 = vld [vmem:[%s242 + $0x1e8] sm:$0xff]
        %v363 = vld [vmem:[%s242 + $0x1f0] sm:$0xff]
        %v364 = vld [vmem:[%s242 + $0x1f8] sm:$0xff]
        %v369 = vunpack.c.l.b16 %v297
        %v370 = vunpack.c.h.b16 %v297
        %v371 = vunpack.c.l.b16 %v298
        %v372 = vunpack.c.h.b16 %v298
        %v373 = vunpack.c.l.b16 %v299
        %v374 = vunpack.c.h.b16 %v299
        %v375 = vunpack.c.l.b16 %v300
        %v376 = vunpack.c.h.b16 %v300
        %v377 = vpack.c.b16 %v373, %v369
        %v378 = vpack.c.b16 %v374, %v370
        %v379 = vpack.c.b16 %v375, %v371
        %v380 = vpack.c.b16 %v376, %v372
        %v449 = vunpack.c.l.b16 %v301
        %v450 = vunpack.c.h.b16 %v301
        %v451 = vunpack.c.l.b16 %v302
        %v452 = vunpack.c.h.b16 %v302
        %v453 = vunpack.c.l.b16 %v303
        %v454 = vunpack.c.h.b16 %v303
        %v455 = vunpack.c.l.b16 %v304
        %v456 = vunpack.c.h.b16 %v304
        %v457 = vunpack.c.l.b16 %v305
        %v458 = vunpack.c.h.b16 %v305
        %v459 = vunpack.c.l.b16 %v306
        %v460 = vunpack.c.h.b16 %v306
        %v461 = vunpack.c.l.b16 %v307
        %v462 = vunpack.c.h.b16 %v307
        %v463 = vunpack.c.l.b16 %v308
        %v464 = vunpack.c.h.b16 %v308
        %v465 = vunpack.c.l.b16 %v309
        %v466 = vunpack.c.h.b16 %v309
        %v467 = vunpack.c.l.b16 %v310
        %v468 = vunpack.c.h.b16 %v310
        %v469 = vunpack.c.l.b16 %v311
        %v470 = vunpack.c.h.b16 %v311
        %v471 = vunpack.c.l.b16 %v312
        %v472 = vunpack.c.h.b16 %v312
        %v473 = vunpack.c.l.b16 %v313
        %v474 = vunpack.c.h.b16 %v313
        %v475 = vunpack.c.l.b16 %v314
        %v476 = vunpack.c.h.b16 %v314
        %v477 = vunpack.c.l.b16 %v315
        %v478 = vunpack.c.h.b16 %v315
        %v479 = vunpack.c.l.b16 %v316
        %v480 = vunpack.c.h.b16 %v316
        %v481 = vunpack.c.l.b16 %v317
        %v482 = vunpack.c.h.b16 %v317
        %v483 = vunpack.c.l.b16 %v318
        %v484 = vunpack.c.h.b16 %v318
        %v485 = vunpack.c.l.b16 %v319
        %v486 = vunpack.c.h.b16 %v319
        %v487 = vunpack.c.l.b16 %v320
        %v488 = vunpack.c.h.b16 %v320
        %v489 = vunpack.c.l.b16 %v321
        %v490 = vunpack.c.h.b16 %v321
        %v491 = vunpack.c.l.b16 %v322
        %v492 = vunpack.c.h.b16 %v322
        %v493 = vunpack.c.l.b16 %v323
        %v494 = vunpack.c.h.b16 %v323
        %v495 = vunpack.c.l.b16 %v324
        %v496 = vunpack.c.h.b16 %v324
        %v497 = vunpack.c.l.b16 %v325
        %v498 = vunpack.c.h.b16 %v325
        %v499 = vunpack.c.l.b16 %v326
        %v500 = vunpack.c.h.b16 %v326
        %v501 = vunpack.c.l.b16 %v327
        %v502 = vunpack.c.h.b16 %v327
        %v503 = vunpack.c.l.b16 %v328
        %v504 = vunpack.c.h.b16 %v328
        %v505 = vunpack.c.l.b16 %v329
        %v506 = vunpack.c.h.b16 %v329
        %v507 = vunpack.c.l.b16 %v330
        %v508 = vunpack.c.h.b16 %v330
        %v509 = vunpack.c.l.b16 %v331
        %v510 = vunpack.c.h.b16 %v331
        %v511 = vunpack.c.l.b16 %v332
        %v512 = vunpack.c.h.b16 %v332
        %v513 = vunpack.c.l.b16 %v333
        %v514 = vunpack.c.h.b16 %v333
        %v515 = vunpack.c.l.b16 %v334
        %v516 = vunpack.c.h.b16 %v334
        %v517 = vunpack.c.l.b16 %v335
        %v518 = vunpack.c.h.b16 %v335
        %v519 = vunpack.c.l.b16 %v336
        %v520 = vunpack.c.h.b16 %v336
        %v521 = vunpack.c.l.b16 %v337
        %v522 = vunpack.c.h.b16 %v337
        %v523 = vunpack.c.l.b16 %v338
        %v524 = vunpack.c.h.b16 %v338
        %v525 = vunpack.c.l.b16 %v339
        %v526 = vunpack.c.h.b16 %v339
        %v527 = vunpack.c.l.b16 %v340
        %v528 = vunpack.c.h.b16 %v340
        %v529 = vunpack.c.l.b16 %v341
        %v530 = vunpack.c.h.b16 %v341
        %v531 = vunpack.c.l.b16 %v342
        %v532 = vunpack.c.h.b16 %v342
        %v533 = vunpack.c.l.b16 %v343
        %v534 = vunpack.c.h.b16 %v343
        %v535 = vunpack.c.l.b16 %v344
        %v536 = vunpack.c.h.b16 %v344
        %v537 = vunpack.c.l.b16 %v345
        %v538 = vunpack.c.h.b16 %v345
        %v539 = vunpack.c.l.b16 %v346
        %v540 = vunpack.c.h.b16 %v346
        %v541 = vunpack.c.l.b16 %v347
        %v542 = vunpack.c.h.b16 %v347
        %v543 = vunpack.c.l.b16 %v348
        %v544 = vunpack.c.h.b16 %v348
        %v545 = vunpack.c.l.b16 %v349
        %v546 = vunpack.c.h.b16 %v349
        %v547 = vunpack.c.l.b16 %v350
        %v548 = vunpack.c.h.b16 %v350
        %v549 = vunpack.c.l.b16 %v351
        %v550 = vunpack.c.h.b16 %v351
        %v551 = vunpack.c.l.b16 %v352
        %v552 = vunpack.c.h.b16 %v352
        %v553 = vunpack.c.l.b16 %v353
        %v554 = vunpack.c.h.b16 %v353
        %v555 = vunpack.c.l.b16 %v354
        %v556 = vunpack.c.h.b16 %v354
        %v557 = vunpack.c.l.b16 %v355
        %v558 = vunpack.c.h.b16 %v355
        %v559 = vunpack.c.l.b16 %v356
        %v560 = vunpack.c.h.b16 %v356
        %v561 = vunpack.c.l.b16 %v357
        %v562 = vunpack.c.h.b16 %v357
        %v563 = vunpack.c.l.b16 %v358
        %v564 = vunpack.c.h.b16 %v358
        %v565 = vunpack.c.l.b16 %v359
        %v566 = vunpack.c.h.b16 %v359
        %v567 = vunpack.c.l.b16 %v360
        %v568 = vunpack.c.h.b16 %v360
        %v569 = vunpack.c.l.b16 %v361
        %v570 = vunpack.c.h.b16 %v361
        %v571 = vunpack.c.l.b16 %v362
        %v572 = vunpack.c.h.b16 %v362
        %v573 = vunpack.c.l.b16 %v363
        %v574 = vunpack.c.h.b16 %v363
        %v575 = vunpack.c.l.b16 %v364
        %v576 = vunpack.c.h.b16 %v364
        %v577 = vpack.c.b16 %v451, %v449
        %v578 = vpack.c.b16 %v452, %v450
        %v579 = vpack.c.b16 %v455, %v453
        %v580 = vpack.c.b16 %v456, %v454
        %v581 = vpack.c.b16 %v459, %v457
        %v582 = vpack.c.b16 %v460, %v458
        %v583 = vpack.c.b16 %v463, %v461
        %v584 = vpack.c.b16 %v464, %v462
        %v585 = vpack.c.b16 %v467, %v465
        %v586 = vpack.c.b16 %v468, %v466
        %v587 = vpack.c.b16 %v471, %v469
        %v588 = vpack.c.b16 %v472, %v470
        %v589 = vpack.c.b16 %v475, %v473
        %v590 = vpack.c.b16 %v476, %v474
        %v591 = vpack.c.b16 %v479, %v477
        %v592 = vpack.c.b16 %v480, %v478
        %v593 = vpack.c.b16 %v483, %v481
        %v594 = vpack.c.b16 %v484, %v482
        %v595 = vpack.c.b16 %v487, %v485
        %v596 = vpack.c.b16 %v488, %v486
        %v597 = vpack.c.b16 %v491, %v489
        %v598 = vpack.c.b16 %v492, %v490
        %v599 = vpack.c.b16 %v495, %v493
        %v600 = vpack.c.b16 %v496, %v494
        %v601 = vpack.c.b16 %v499, %v497
        %v602 = vpack.c.b16 %v500, %v498
        %v603 = vpack.c.b16 %v503, %v501
        %v604 = vpack.c.b16 %v504, %v502
        %v605 = vpack.c.b16 %v507, %v505
        %v606 = vpack.c.b16 %v508, %v506
        %v607 = vpack.c.b16 %v511, %v509
        %v608 = vpack.c.b16 %v512, %v510
        %v609 = vpack.c.b16 %v515, %v513
        %v610 = vpack.c.b16 %v516, %v514
        %v611 = vpack.c.b16 %v519, %v517
        %v612 = vpack.c.b16 %v520, %v518
        %v613 = vpack.c.b16 %v523, %v521
        %v614 = vpack.c.b16 %v524, %v522
        %v615 = vpack.c.b16 %v527, %v525
        %v616 = vpack.c.b16 %v528, %v526
        %v617 = vpack.c.b16 %v531, %v529
        %v618 = vpack.c.b16 %v532, %v530
        %v619 = vpack.c.b16 %v535, %v533
        %v620 = vpack.c.b16 %v536, %v534
        %v621 = vpack.c.b16 %v539, %v537
        %v622 = vpack.c.b16 %v540, %v538
        %v623 = vpack.c.b16 %v543, %v541
        %v624 = vpack.c.b16 %v544, %v542
        %v625 = vpack.c.b16 %v547, %v545
        %v626 = vpack.c.b16 %v548, %v546
        %v627 = vpack.c.b16 %v551, %v549
        %v628 = vpack.c.b16 %v552, %v550
        %v629 = vpack.c.b16 %v555, %v553
        %v630 = vpack.c.b16 %v556, %v554
        %v631 = vpack.c.b16 %v559, %v557
        %v632 = vpack.c.b16 %v560, %v558
        %v633 = vpack.c.b16 %v563, %v561
        %v634 = vpack.c.b16 %v564, %v562
        %v635 = vpack.c.b16 %v567, %v565
        %v636 = vpack.c.b16 %v568, %v566
        %v637 = vpack.c.b16 %v571, %v569
        %v638 = vpack.c.b16 %v572, %v570
        %v639 = vpack.c.b16 %v575, %v573
        %v640 = vpack.c.b16 %v576, %v574
        %705 = vmatprep.subr.bf16.mxu0 %v578
        %706 = vmatpush1.bf16.msra.mxu0 %v577
        %707 = vmatprep.subr.bf16.mxu0 %v580
        %708 = vmatpush1.bf16.msra.mxu0 %v579
        %709 = vmatprep.subr.bf16.mxu0 %v582
        %710 = vmatpush1.bf16.msra.mxu0 %v581
        %711 = vmatprep.subr.bf16.mxu0 %v584
        %712 = vmatpush1.bf16.msra.mxu0 %v583
        %713 = vmatprep.subr.bf16.mxu0 %v586
        %714 = vmatpush1.bf16.msra.mxu0 %v585
        %715 = vmatprep.subr.bf16.mxu0 %v588
        %716 = vmatpush1.bf16.msra.mxu0 %v587
        %717 = vmatprep.subr.bf16.mxu0 %v590
        %718 = vmatpush1.bf16.msra.mxu0 %v589
        %719 = vmatprep.subr.bf16.mxu0 %v592
        %720 = vmatpush1.bf16.msra.mxu0 %v591
        %721 = vmatprep.subr.bf16.mxu0 %v594
        %722 = vmatpush1.bf16.msra.mxu0 %v593
        %723 = vmatprep.subr.bf16.mxu0 %v596
        %724 = vmatpush1.bf16.msra.mxu0 %v595
        %725 = vmatprep.subr.bf16.mxu0 %v598
        %726 = vmatpush1.bf16.msra.mxu0 %v597
        %727 = vmatprep.subr.bf16.mxu0 %v600
        %728 = vmatpush1.bf16.msra.mxu0 %v599
        %729 = vmatprep.subr.bf16.mxu0 %v602
        %730 = vmatpush1.bf16.msra.mxu0 %v601
        %731 = vmatprep.subr.bf16.mxu0 %v604
        %732 = vmatpush1.bf16.msra.mxu0 %v603
        %733 = vmatprep.subr.bf16.mxu0 %v606
        %734 = vmatpush1.bf16.msra.mxu0 %v605
        %735 = vmatprep.subr.bf16.mxu0 %v608
        %736 = vmatpush1.bf16.msra.mxu0 %v607
        %737 = vmatprep.mubr.bf16.mxu0 %v378
        %738 = vmatmul.mubr.bf16.gmra.mrb[0].mxu0 %v377
        %v739 = vpop.f32.mrb[0].mxu0
        %v740 = vadd.f32 0.0, %v739
        %v741 = vpop.f32.mrb[0].mxu0
        %v742 = vadd.f32 0.0, %v741
        %v743 = vpop.f32.mrb[0].mxu0
        %v744 = vadd.f32 0.0, %v743
        %v745 = vpop.f32.mrb[0].mxu0
        %v746 = vadd.f32 0.0, %v745
        %747 = vdwg.mxu0
        %748 = vmatprep.subr.bf16.mxu0 %v610
        %749 = vmatpush1.bf16.msra.mxu0 %v609
        %750 = vmatprep.subr.bf16.mxu0 %v612
        %751 = vmatpush1.bf16.msra.mxu0 %v611
        %752 = vmatprep.subr.bf16.mxu0 %v614
        %753 = vmatpush1.bf16.msra.mxu0 %v613
        %754 = vmatprep.subr.bf16.mxu0 %v616
        %755 = vmatpush1.bf16.msra.mxu0 %v615
        %756 = vmatprep.subr.bf16.mxu0 %v618
        %757 = vmatpush1.bf16.msra.mxu0 %v617
        %758 = vmatprep.subr.bf16.mxu0 %v620
        %759 = vmatpush1.bf16.msra.mxu0 %v619
        %760 = vmatprep.subr.bf16.mxu0 %v622
        %761 = vmatpush1.bf16.msra.mxu0 %v621
        %762 = vmatprep.subr.bf16.mxu0 %v624
        %763 = vmatpush1.bf16.msra.mxu0 %v623
        %764 = vmatprep.subr.bf16.mxu0 %v626
        %765 = vmatpush1.bf16.msra.mxu0 %v625
        %766 = vmatprep.subr.bf16.mxu0 %v628
        %767 = vmatpush1.bf16.msra.mxu0 %v627
        %768 = vmatprep.subr.bf16.mxu0 %v630
        %769 = vmatpush1.bf16.msra.mxu0 %v629
        %770 = vmatprep.subr.bf16.mxu0 %v632
        %771 = vmatpush1.bf16.msra.mxu0 %v631
        %772 = vmatprep.subr.bf16.mxu0 %v634
        %773 = vmatpush1.bf16.msra.mxu0 %v633
        %774 = vmatprep.subr.bf16.mxu0 %v636
        %775 = vmatpush1.bf16.msra.mxu0 %v635
        %776 = vmatprep.subr.bf16.mxu0 %v638
        %777 = vmatpush1.bf16.msra.mxu0 %v637
        %778 = vmatprep.subr.bf16.mxu0 %v640
        %779 = vmatpush1.bf16.msra.mxu0 %v639
        %780 = vmatprep.mubr.bf16.mxu0 %v380
        %781 = vmatmul.mubr.bf16.gmra.mrb[0].mxu0 %v379
        %v782 = vpop.f32.mrb[0].mxu0
        %v783 = vadd.f32 %v740, %v782
        %v784 = vpop.f32.mrb[0].mxu0
        %v785 = vadd.f32 %v742, %v784
        %v786 = vpop.f32.mrb[0].mxu0
        %v787 = vadd.f32 %v744, %v786
        %v788 = vpop.f32.mrb[0].mxu0
        %v789 = vadd.f32 %v746, %v788
        %790 = vdwg.mxu0
        %v791 = vadd.f32 %v293, %v783
        %v792 = vadd.f32 %v294, %v785
        %v793 = vadd.f32 %v295, %v787
        %v794 = vadd.f32 %v296, %v789
        %795 = vst [vmem:[#allocation2] sm:$0xff] %v791
        %796 = vst [vmem:[#allocation2 + $0x8] sm:$0xff] %v792
        %797 = vst [vmem:[#allocation2 + $0x10] sm:$0xff] %v793
        %798 = vst [vmem:[#allocation2 + $0x18] sm:$0xff] %v794
        %p799 = scmp.eq.s32.totalorder %s30, 1
        // Predicated region
        $region45: #{tpu_custom_call.1} parent=31 // pred_check
          %p800 = pneg %p799
        $region46: #{tpu_custom_call.1} parent=31 // pred_check_branch
          %802 = sbr.rel (%p800) target = $region48
        $region47: #{tpu_custom_call.1} parent=31 // pred_region
          %v803 = vld [vmem:[#allocation2] sm:$0xff]
          %v804 = vld [vmem:[#allocation2 + $0x8] sm:$0xff]
          %v805 = vld [vmem:[#allocation2 + $0x10] sm:$0xff]
          %v806 = vld [vmem:[#allocation2 + $0x18] sm:$0xff]
          %v807 = vld [vmem:[%s281] sm:$0x3]
          %v809 = vlaneseq
          %v810 = vshrl.u32 %v809, 7
          %v811 = vsub.s32 0, %v810
          %v812 = vrot.slane %v807, %v811
          %v813 = vlaneseq
          %v814 = vshrl.u32 %v813, 7
          %v815 = vsub.s32 1, %v814
          %v816 = vrot.slane %v807, %v815
          %v819 = vadd.f32 %v803, %v812
          %v820 = vadd.f32 %v804, %v816
          %v821 = vadd.f32 %v805, %v812
          %v822 = vadd.f32 %v806, %v816
          %823 = vst [vmem:[%s273] sm:$0xff] %v819
          %824 = vst [vmem:[%s273 + $0x8] sm:$0xff] %v820
          %825 = vst [vmem:[%s273 + $0x10] sm:$0xff] %v821
          %826 = vst [vmem:[%s273 + $0x18] sm:$0xff] %v822
        $region48: #{tpu_custom_call.1} parent=31 // pred_fallthru
          _
        %s827 = sand.u32 %s134, 1
        %s828 = scalar_lea.sflag [#allocation5], %s827
        %s829 = sand.u32 %s134, 1
        %s830 = smul.addr %s829, 32
        %s831 = scalar_lea.vmem [#allocation8], %s830
        // Predicated region
        $region49: #{tpu_custom_call.1} parent=31 // pred_check
          %p832 = pneg %p144
        $region50: #{tpu_custom_call.1} parent=31 // pred_check_branch
          %834 = sbr.rel (%p832) target = $region52
        $region51: #{tpu_custom_call.1} parent=31 // pred_region
          %s835 = smul.u32 2, %s28
          %s836 = smul.u32 2, %s29
          %s838 = ssub.s32 512, 512
          %839 = vsyncadd %s828, %s838
          %s840 = smul.addr %s835, 4
          %s841 = sadd.s32 %s836, %s840
          %s842 = smul.addr %s841, 128
          %s843 = scalar_lea.hbm %s3, %s842
          %s844 = sshll.u32 %s831, 4
          %s845 = int_to_ptr.vmem [resolvable:$true] %s844
          %850 = dma.vmem_to_hbm [thread:$0]  %s845, 512, %s843, %s828, 256, 512, 16
        $region52: #{tpu_custom_call.1} parent=31 // pred_fallthru
          _
      $region32: #{tpu_custom_call.1} parent=5 // pred_fallthru
        _
      %p851 = scmp.le.s32.totalorder 2, %s18
      // Predicated region
      $region53: #{tpu_custom_call.1} parent=5 // pred_check
        %p852 = pneg %p851
      $region54: #{tpu_custom_call.1} parent=5 // pred_check_branch
        %854 = sbr.rel (%p852) target = $region56
      $region55: #{tpu_custom_call.1} parent=5 // pred_region
        %s855 = ssub.s32 %s18, 2
        // Predicated region
        $region57: #{tpu_custom_call.1} parent=55 // pred_check
          %p856 = pneg %p150
        $region58: #{tpu_custom_call.1} parent=55 // pred_check_branch
          %858 = sbr.rel (%p856) target = $region60
        $region59: #{tpu_custom_call.1} parent=55 // pred_region
          %s859 = sand.u32 %s135, 1
          %s860 = scalar_lea.sflag [#allocation5], %s859
          %s861 = sand.u32 %s135, 1
          %s862 = smul.addr %s861, 32
          %s863 = scalar_lea.vmem [#allocation8], %s862
          %864 = dma.done %s860, 512
        $region60: #{tpu_custom_call.1} parent=55 // pred_fallthru
          _
      $region56: #{tpu_custom_call.1} parent=5 // pred_fallthru
        _
    $region6: #{tpu_custom_call.1} parent=1 // loop_footer
      %s22 = sadd.s32 1, %s18
    $region7: #{tpu_custom_call.1} parent=1 // loop_footer_branch
      %17 = sbr.rel target = $region3
    $region8: #{tpu_custom_call.1} parent=1 // loop_exit
      _
    %865 = vsyncpa [#allocation4], 1
    %s866 = scalar_lea.sflag [#allocation4], 1
    %867 = vsyncpa %s866, 1
    %868 = vsyncpa [#allocation7], 1
    %s869 = scalar_lea.sflag [#allocation7], 1
    %870 = vsyncpa %s869, 1
    %871 = vsyncpa [#allocation5], 1
    %s872 = scalar_lea.sflag [#allocation5], 1
    %873 = vsyncpa %s872, 1

</llo_original>
